<compile_context>
chip_gen: v6e
topology: v6e:2x2x1
jax: 0.10.0
libtpu: 0.0.40
codegen_flags: <defaults>
</compile_context>

<pallas_src>
import jax
import jax.numpy as jnp
from jax.experimental import pallas as pl
from jax.experimental.pallas import tpu as pltpu


def _round_up(x, m):
    return ((x + m - 1) // m) * m


_NEG = -1e30  # bias for padded vocab columns -> exp() == 0 in the softmax


def ngram_kernel(idx_ref, emb_ref, w1_ref, b1_ref, w2_ref, b2_ref, out_ref):
    """One batch tile of the NGram forward pass.

    idx_ref : (TB, C)   int32  word indices for TB contexts
    emb_ref : (V, E)    f32    embedding table (VMEM resident)
    w1_ref  : (C*E, H)  f32    linear1 weight (input-major)
    b1_ref  : (1, H)    f32
    w2_ref  : (H, Vp)   f32    linear2 weight, vocab padded to Vp (mult of 128)
    b2_ref  : (1, Vp)   f32    padded columns hold -1e30
    out_ref : (TB, Vp)  f32    log-probs (padded columns sliced off outside)
    """
    idx = idx_ref[...]                       # (TB, C) int32
    emb = emb_ref[...]                       # (V, E)  f32
    tb, ctx = idx.shape
    vocab, edim = emb.shape

    # Fused embedding gather + linear1, expressed as MXU matmuls:
    #   x_flat @ W1 == sum_c one_hot(idx[:, c]) @ emb @ W1[c*E:(c+1)*E, :]
    vocab_iota = jax.lax.broadcasted_iota(jnp.int32, (tb, vocab), 1)
    acc = None
    for c in range(ctx):
        onehot = (vocab_iota == idx[:, c:c + 1]).astype(jnp.float32)          # (TB, V)
        xc = jnp.dot(onehot, emb, preferred_element_type=jnp.float32)          # (TB, E)
        term = jnp.dot(xc, w1_ref[c * edim:(c + 1) * edim, :],
                       preferred_element_type=jnp.float32)                     # (TB, H)
        acc = term if acc is None else acc + term

    h = jnp.maximum(acc + b1_ref[...], 0.0)                                    # (TB, H)

    # linear2: padded vocab columns have w2 == 0 and b2 == -1e30 -> logits=-1e30
    logits = jnp.dot(h, w2_ref[...], preferred_element_type=jnp.float32) + b2_ref[...]

    # numerically-stable log_softmax over the lane-dense vocab axis
    m = jnp.max(logits, axis=-1, keepdims=True)
    z = logits - m
    lse = jnp.log(jnp.sum(jnp.exp(z), axis=-1, keepdims=True))
    out_ref[...] = z - lse


def _ngram_forward_batched(idx_batch, emb_table, w1, b1, w2, b2):
    """Batched forward: idx_batch (B, C) int32 -> (B, V) f32 log-probs."""
    B, C = idx_batch.shape
    V, E = emb_table.shape
    H = w1.shape[1]

    # --- pad to TPU-friendly shapes -------------------------------------
    tb = min(128, _round_up(B, 8))          # batch tile: sublane-aligned, <=128
    b_pad = _round_up(B, tb)
    v_pad = _round_up(V, 128)               # lane-dense vocab axis

    idx_p = jnp.pad(idx_batch.astype(jnp.int32), ((0, b_pad - B), (0, 0)))
    w2_p = jnp.pad(w2, ((0, 0), (0, v_pad - V)))
    b2_p = jnp.pad(b2, ((0, 0), (0, v_pad - V)), constant_values=_NEG)

    grid = (b_pad // tb,)

    out = pl.pallas_call(
        ngram_kernel,
        out_shape=jax.ShapeDtypeStruct((b_pad, v_pad), jnp.float32),
        grid_spec=pltpu.PrefetchScalarGridSpec(
            num_scalar_prefetch=0,
            grid=grid,
            in_specs=[
                pl.BlockSpec((tb, C), lambda i: (i, 0)),       # indices: per-tile
                pl.BlockSpec((V, E), lambda i: (0, 0)),        # emb table: resident
                pl.BlockSpec((C * E, H), lambda i: (0, 0)),    # w1: resident
                pl.BlockSpec((1, H), lambda i: (0, 0)),        # b1
                pl.BlockSpec((H, v_pad), lambda i: (0, 0)),    # w2 (vocab-padded)
                pl.BlockSpec((1, v_pad), lambda i: (0, 0)),    # b2 (vocab-padded)
            ],
            out_specs=pl.BlockSpec((tb, v_pad), lambda i: (i, 0)),
        ),
        compiler_params=pltpu.CompilerParams(
            # batch tiles are independent -> shard across TCs (v7x megacore)
            dimension_semantics=("parallel",),
        ),
        # TODO(synk): for realistic V (~50k), tile the vocab axis with an
        # online log-softmax so w2 streams under BlockSpec double-buffering.
    )(idx_p, emb_table, w1, b1, w2_p, b2_p)

    return out[:B, :V]


ngram_forward_batched = jax.jit(_ngram_forward_batched)


def ngram_forward(inputs, emb_table, w1, b1, w2, b2):
    """Single-context forward matching the PyTorch module: inputs (C,) -> (1, V)."""
    return ngram_forward_batched(inputs.reshape(1, -1), emb_table, w1, b1, w2, b2)


if __name__ == "__main__":
    vocab_size = 16
    embedding_dim = 8
    context_size = 2
    hidden = 128
    d_in = context_size * embedding_dim

    key = jax.random.PRNGKey(0)
    k_emb, k_w1, k_b1, k_w2, k_b2, k_idx = jax.random.split(key, 6)

    # Deterministic parameter init (PyTorch-compatible shapes; weights stored
    # input-major so the kernel does x @ W + b).
    emb_table = jax.random.normal(k_emb, (vocab_size, embedding_dim), jnp.float32)
    lim1 = 1.0 / (d_in ** 0.5)
    w1 = jax.random.uniform(k_w1, (d_in, hidden), jnp.float32, -lim1, lim1)
    b1 = jax.random.uniform(k_b1, (1, hidden), jnp.float32, -lim1, lim1)
    lim2 = 1.0 / (hidden ** 0.5)
    w2 = jax.random.uniform(k_w2, (hidden, vocab_size), jnp.float32, -lim2, lim2)
    b2 = jax.random.uniform(k_b2, (1, vocab_size), jnp.float32, -lim2, lim2)

    # --- single context (module semantics: forward(inputs) -> (1, V)) -------
    inputs = jax.random.randint(k_idx, (context_size,), 0, vocab_size, jnp.int32)
    log_probs = jax.block_until_ready(
        ngram_forward(inputs, emb_table, w1, b1, w2, b2))

    x_ref = emb_table[inputs].reshape(1, -1)
    h_ref = jnp.maximum(x_ref @ w1 + b1, 0.0)
    ref = jax.nn.log_softmax(h_ref @ w2 + b2, axis=-1)
    assert log_probs.shape == (1, vocab_size)
    assert jnp.allclose(log_probs, ref, atol=1e-5), "single-context mismatch"
    assert jnp.allclose(jnp.sum(jnp.exp(log_probs)), 1.0, atol=1e-5)

    # --- batched path (amortizes dispatch, fills the MXU) -------------------
    batch = 4
    idx_batch = jax.random.randint(
        k_idx, (batch, context_size), 0, vocab_size, jnp.int32)
    log_probs_b = jax.block_until_ready(
        ngram_forward_batched(idx_batch, emb_table, w1, b1, w2, b2))

    xb = emb_table[idx_batch].reshape(batch, -1)
    hb = jnp.maximum(xb @ w1 + b1, 0.0)
    ref_b = jax.nn.log_softmax(hb @ w2 + b2, axis=-1)
    assert log_probs_b.shape == (batch, vocab_size)
    assert jnp.allclose(log_probs_b, ref_b, atol=1e-5), "batched mismatch"

    print("KERNEL_OK")
</pallas_src>

<mosaic_0001>
module attributes {stable_mosaic.version = 11 : i64} {
  func.func @ngram_kernel(%arg0: i32, %arg1: memref<8x2xi32, #tpu.memory_space<vmem>>, %arg2: memref<16x8xf32, #tpu.memory_space<vmem>>, %arg3: memref<16x128xf32, #tpu.memory_space<vmem>>, %arg4: memref<1x128xf32, #tpu.memory_space<vmem>>, %arg5: memref<128x128xf32, #tpu.memory_space<vmem>>, %arg6: memref<1x128xf32, #tpu.memory_space<vmem>>, %arg7: memref<8x128xf32, #tpu.memory_space<vmem>>) attributes {dimension_semantics = [#tpu.dimension_semantics<parallel>], iteration_bounds = array<i64: 1>, scalar_prefetch = 0 : i64, scratch_operands = 0 : i64, tpu.core_type = #tpu.core_type<tc>, window_params = [{transform_indices = @transform_0, window_bounds = array<i64: 8, 2>}, {pipeline_mode = #tpu.pipeline_mode<synchronous>, transform_indices = @transform_1, window_bounds = array<i64: 16, 8>}, {pipeline_mode = #tpu.pipeline_mode<synchronous>, transform_indices = @transform_2, window_bounds = array<i64: 16, 128>}, {pipeline_mode = #tpu.pipeline_mode<synchronous>, transform_indices = @transform_3, window_bounds = array<i64: 1, 128>}, {pipeline_mode = #tpu.pipeline_mode<synchronous>, transform_indices = @transform_4, window_bounds = array<i64: 128, 128>}, {pipeline_mode = #tpu.pipeline_mode<synchronous>, transform_indices = @transform_5, window_bounds = array<i64: 1, 128>}, {transform_indices = @transform_6, window_bounds = array<i64: 8, 128>}]} {
    %c0 = arith.constant 0 : index
    %c0_0 = arith.constant 0 : index
    %0 = vector.load %arg1[%c0, %c0_0] : memref<8x2xi32, #tpu.memory_space<vmem>>, vector<8x2xi32>
    %c0_1 = arith.constant 0 : index
    %c0_2 = arith.constant 0 : index
    %1 = vector.load %arg2[%c0_1, %c0_2] : memref<16x8xf32, #tpu.memory_space<vmem>>, vector<16x8xf32>
    %2 = tpu.iota {dimensions = array<i32: 1>} : vector<8x16xi32>
    %3 = vector.extract_strided_slice %0 {offsets = [0, 0], sizes = [8, 1], strides = [1, 1]} : vector<8x2xi32> to vector<8x1xi32>
    %4 = vector.broadcast %3 : vector<8x1xi32> to vector<8x16xi32>
    %5 = arith.cmpi eq, %2, %4 : vector<8x16xi32>
    %6 = arith.extui %5 : vector<8x16xi1> to vector<8x16xi32>
    %7 = arith.sitofp %6 : vector<8x16xi32> to vector<8x16xf32>
    %cst = arith.constant dense<0.000000e+00> : vector<8x8xf32>
    %8 = tpu.matmul %7, %1, %cst {dimension_numbers = #tpu.dot_dimension_numbers<[1], [0], [0], [1], [0, 0, 1, 1], [], []>} : vector<8x16xf32>, vector<16x8xf32>, vector<8x8xf32> -> vector<8x8xf32>
    %c0_3 = arith.constant 0 : index
    %c0_4 = arith.constant 0 : index
    %9 = vector.load %arg3[%c0_3, %c0_4] : memref<16x128xf32, #tpu.memory_space<vmem>>, vector<8x128xf32>
    %cst_5 = arith.constant dense<0.000000e+00> : vector<8x128xf32>
    %10 = tpu.matmul %8, %9, %cst_5 {dimension_numbers = #tpu.dot_dimension_numbers<[1], [0], [0], [1], [0, 0, 1, 1], [], []>} : vector<8x8xf32>, vector<8x128xf32>, vector<8x128xf32> -> vector<8x128xf32>
    %11 = vector.extract_strided_slice %0 {offsets = [0, 1], sizes = [8, 1], strides = [1, 1]} : vector<8x2xi32> to vector<8x1xi32>
    %12 = vector.broadcast %11 : vector<8x1xi32> to vector<8x16xi32>
    %13 = arith.cmpi eq, %2, %12 : vector<8x16xi32>
    %14 = arith.extui %13 : vector<8x16xi1> to vector<8x16xi32>
    %15 = arith.sitofp %14 : vector<8x16xi32> to vector<8x16xf32>
    %cst_6 = arith.constant dense<0.000000e+00> : vector<8x8xf32>
    %16 = tpu.matmul %15, %1, %cst_6 {dimension_numbers = #tpu.dot_dimension_numbers<[1], [0], [0], [1], [0, 0, 1, 1], [], []>} : vector<8x16xf32>, vector<16x8xf32>, vector<8x8xf32> -> vector<8x8xf32>
    %c8 = arith.constant 8 : index
    %c0_7 = arith.constant 0 : index
    %17 = vector.load %arg3[%c8, %c0_7] : memref<16x128xf32, #tpu.memory_space<vmem>>, vector<8x128xf32>
    %cst_8 = arith.constant dense<0.000000e+00> : vector<8x128xf32>
    %18 = tpu.matmul %16, %17, %cst_8 {dimension_numbers = #tpu.dot_dimension_numbers<[1], [0], [0], [1], [0, 0, 1, 1], [], []>} : vector<8x8xf32>, vector<8x128xf32>, vector<8x128xf32> -> vector<8x128xf32>
    %19 = arith.addf %10, %18 : vector<8x128xf32>
    %c0_9 = arith.constant 0 : index
    %c0_10 = arith.constant 0 : index
    %20 = vector.load %arg4[%c0_9, %c0_10] : memref<1x128xf32, #tpu.memory_space<vmem>>, vector<1x128xf32>
    %21 = vector.broadcast %20 : vector<1x128xf32> to vector<8x128xf32>
    %22 = arith.addf %19, %21 : vector<8x128xf32>
    %cst_11 = arith.constant 0.000000e+00 : f32
    %23 = vector.broadcast %cst_11 : f32 to vector<8x128xf32>
    %24 = arith.maximumf %22, %23 : vector<8x128xf32>
    %c0_12 = arith.constant 0 : index
    %c0_13 = arith.constant 0 : index
    %25 = vector.load %arg5[%c0_12, %c0_13] : memref<128x128xf32, #tpu.memory_space<vmem>>, vector<128x128xf32>
    %cst_14 = arith.constant dense<0.000000e+00> : vector<8x128xf32>
    %26 = tpu.matmul %24, %25, %cst_14 {dimension_numbers = #tpu.dot_dimension_numbers<[1], [0], [0], [1], [0, 0, 1, 1], [], []>} : vector<8x128xf32>, vector<128x128xf32>, vector<8x128xf32> -> vector<8x128xf32>
    %c0_15 = arith.constant 0 : index
    %c0_16 = arith.constant 0 : index
    %27 = vector.load %arg6[%c0_15, %c0_16] : memref<1x128xf32, #tpu.memory_space<vmem>>, vector<1x128xf32>
    %28 = vector.broadcast %27 : vector<1x128xf32> to vector<8x128xf32>
    %29 = arith.addf %26, %28 : vector<8x128xf32>
    %cst_17 = arith.constant dense<0xFF800000> : vector<8xf32>
    %30 = vector.multi_reduction <maximumf>, %29, %cst_17 [1] : vector<8x128xf32> to vector<8xf32>
    %31 = vector.shape_cast %30 : vector<8xf32> to vector<8x1xf32>
    %32 = vector.broadcast %31 : vector<8x1xf32> to vector<8x128xf32>
    %33 = arith.subf %29, %32 : vector<8x128xf32>
    %34 = math.exp %33 : vector<8x128xf32>
    %cst_18 = arith.constant dense<0.000000e+00> : vector<8xf32>
    %35 = vector.multi_reduction <add>, %34, %cst_18 [1] : vector<8x128xf32> to vector<8xf32>
    %36 = vector.shape_cast %35 : vector<8xf32> to vector<8x1xf32>
    %37 = math.log %36 : vector<8x1xf32>
    %38 = vector.broadcast %37 : vector<8x1xf32> to vector<8x128xf32>
    %39 = arith.subf %33, %38 : vector<8x128xf32>
    %c0_19 = arith.constant 0 : index
    %c0_20 = arith.constant 0 : index
    %40 = vector.load %arg7[%c0_19, %c0_20] : memref<8x128xf32, #tpu.memory_space<vmem>>, vector<8x128xf32>
    tpu.vector_store %arg7[%c0_19, %c0_20], %39 {strides = array<i32>} : memref<8x128xf32, #tpu.memory_space<vmem>>, vector<8x128xf32>,
    return
  }
  func.func @transform_0(%arg0: i32) -> (i32, i32) {
    %c0_i32 = arith.constant 0 : i32
    %c0_i32_0 = arith.constant 0 : i32
    return %arg0, %c0_i32 : i32, i32
  }
  func.func @transform_1(%arg0: i32) -> (i32, i32) {
    %c0_i32 = arith.constant 0 : i32
    %c0_i32_0 = arith.constant 0 : i32
    %c0_i32_1 = arith.constant 0 : i32
    return %c0_i32, %c0_i32_0 : i32, i32
  }
  func.func @transform_2(%arg0: i32) -> (i32, i32) {
    %c0_i32 = arith.constant 0 : i32
    %c0_i32_0 = arith.constant 0 : i32
    %c0_i32_1 = arith.constant 0 : i32
    return %c0_i32, %c0_i32_0 : i32, i32
  }
  func.func @transform_3(%arg0: i32) -> (i32, i32) {
    %c0_i32 = arith.constant 0 : i32
    %c0_i32_0 = arith.constant 0 : i32
    %c0_i32_1 = arith.constant 0 : i32
    return %c0_i32, %c0_i32_0 : i32, i32
  }
  func.func @transform_4(%arg0: i32) -> (i32, i32) {
    %c0_i32 = arith.constant 0 : i32
    %c0_i32_0 = arith.constant 0 : i32
    %c0_i32_1 = arith.constant 0 : i32
    return %c0_i32, %c0_i32_0 : i32, i32
  }
  func.func @transform_5(%arg0: i32) -> (i32, i32) {
    %c0_i32 = arith.constant 0 : i32
    %c0_i32_0 = arith.constant 0 : i32
    %c0_i32_1 = arith.constant 0 : i32
    return %c0_i32, %c0_i32_0 : i32, i32
  }
  func.func @transform_6(%arg0: i32) -> (i32, i32) {
    %c0_i32 = arith.constant 0 : i32
    %c0_i32_0 = arith.constant 0 : i32
    return %arg0, %c0_i32 : i32, i32
  }
}

</mosaic_0001>

<llo_original>
// kernel: _ngram_forward_batched.1
$region0: #{_ngram_forward_batched.1}
  #allocation0 [shape = 'u32[]', space=smem, size = 0x4, offset = 0x4, fixed_abs, tag = 'smem constant byte address 0x4 - core index']
  #allocation1 [shape = 'u32[144,128]{1,0:T(1,128)}', space=vmem, size = 0x12000, scoped, tag = 'internal scratch']
  %s0 = inlined_call_operand.vmem [shape: s32[8,2], index: 0, kind: input, shape index: {}]
  %s1 = inlined_call_operand.vmem [shape: f32[16,8], index: 1, kind: input, shape index: {}]
  %s2 = inlined_call_operand.vmem [shape: f32[16,128], index: 2, kind: input, shape index: {}]
  %s3 = inlined_call_operand.vmem [shape: f32[1,128], index: 3, kind: input, shape index: {}]
  %s4 = inlined_call_operand.vmem [shape: f32[128,128], index: 4, kind: input, shape index: {}]
  %s5 = inlined_call_operand.vmem [shape: f32[1,128], index: 5, kind: input, shape index: {}]
  %s6 = inlined_call_operand.vmem [shape: f32[8,128], index: 6, kind: output, shape index: {}]
  %s7 = sld [smem:[#allocation0]]
  $region34: #{_ngram_forward_batched.1} parent=0
    _
  %s9 = ssub.s32 1, %s7
  %s10 = scalar_select 0, %s9, %s7
  // Predicated region
  $region2: #{_ngram_forward_batched.1} parent=0 // pred_check
    _
  $region3: #{_ngram_forward_batched.1} parent=0 // pred_check_branch
    %12 = sbr.rel (0) target = $region5
  $region4: #{_ngram_forward_batched.1} parent=0 // pred_region
    _
  $region5: #{_ngram_forward_batched.1} parent=0 // pred_fallthru
    _
  // Predicated region
  $region6: #{_ngram_forward_batched.1} parent=0 // pred_check
    _
  $region7: #{_ngram_forward_batched.1} parent=0 // pred_check_branch
    %14 = sbr.rel (0) target = $region9
  $region8: #{_ngram_forward_batched.1} parent=0 // pred_region
    _
  $region9: #{_ngram_forward_batched.1} parent=0 // pred_fallthru
    _
  // Predicated region
  $region10: #{_ngram_forward_batched.1} parent=0 // pred_check
    _
  $region11: #{_ngram_forward_batched.1} parent=0 // pred_check_branch
    %16 = sbr.rel (0) target = $region13
  $region12: #{_ngram_forward_batched.1} parent=0 // pred_region
    _
  $region13: #{_ngram_forward_batched.1} parent=0 // pred_fallthru
    _
  // Predicated region
  $region14: #{_ngram_forward_batched.1} parent=0 // pred_check
    _
  $region15: #{_ngram_forward_batched.1} parent=0 // pred_check_branch
    %18 = sbr.rel (0) target = $region17
  $region16: #{_ngram_forward_batched.1} parent=0 // pred_region
    _
  $region17: #{_ngram_forward_batched.1} parent=0 // pred_fallthru
    _
  // Predicated region
  $region18: #{_ngram_forward_batched.1} parent=0 // pred_check
    _
  $region19: #{_ngram_forward_batched.1} parent=0 // pred_check_branch
    %20 = sbr.rel (0) target = $region21
  $region20: #{_ngram_forward_batched.1} parent=0 // pred_region
    _
  $region21: #{_ngram_forward_batched.1} parent=0 // pred_fallthru
    _
  // Predicated region
  $region22: #{_ngram_forward_batched.1} parent=0 // pred_check
    _
  $region23: #{_ngram_forward_batched.1} parent=0 // pred_check_branch
    %22 = sbr.rel (0) target = $region25
  $region24: #{_ngram_forward_batched.1} parent=0 // pred_region
    _
  $region25: #{_ngram_forward_batched.1} parent=0 // pred_fallthru
    _
  %v23 = vld [vmem:[%s0] sm:$0xff]
  %v24 = vld [vmem:[%s1] sm:$0xff]
  %v25 = vld [vmem:[%s1 + $0x8] sm:$0xff]
  %v26 = vlaneseq
  %v27 = vand.u32 %v26, 127
  %28 = vset.pattern.permute.xlu0 0
  %29 = vperm.xlu0 %28, %v23
  %v30 = vpop.permute.xlu0 %29
  %vm31 = vcmp.eq.s32.totalorder %v27, %v30
  %v32 = vsel %vm31, 1, 0
  %v33 = vcvt.s32.f32 %v32
  %vm34 = vcmask 130048
  %v36 = vsel %vm34, %v33, 0
  %38 = vmatprep.subr.mxu0 0.0
  %39 = vmatpush1.msra.mxu0 0.0
  %40 = vmatprep.subr.mxu0 0.0
  %41 = vmatpush1.msra.mxu0 0.0
  %42 = vmatprep.subr.mxu0 0.0
  %43 = vmatpush1.msra.mxu0 0.0
  %44 = vmatprep.subr.mxu0 0.0
  %45 = vmatpush1.msra.mxu0 0.0
  %46 = vmatprep.subr.mxu0 0.0
  %47 = vmatpush1.msra.mxu0 0.0
  %48 = vmatprep.subr.mxu0 0.0
  %49 = vmatpush1.msra.mxu0 0.0
  %50 = vmatprep.subr.mxu0 0.0
  %51 = vmatpush1.msra.mxu0 0.0
  %52 = vmatprep.subr.mxu0 0.0
  %53 = vmatpush1.msra.mxu0 0.0
  %54 = vmatprep.subr.mxu0 0.0
  %55 = vmatpush1.msra.mxu0 0.0
  %56 = vmatprep.subr.mxu0 0.0
  %57 = vmatpush1.msra.mxu0 0.0
  %58 = vmatprep.subr.mxu0 0.0
  %59 = vmatpush1.msra.mxu0 0.0
  %60 = vmatprep.subr.mxu0 0.0
  %61 = vmatpush1.msra.mxu0 0.0
  %62 = vmatprep.subr.mxu0 0.0
  %63 = vmatpush1.msra.mxu0 0.0
  %64 = vmatprep.subr.mxu0 0.0
  %65 = vmatpush1.msra.mxu0 0.0
  %66 = vmatprep.subr.mxu0 0.0
  %67 = vmatpush1.msra.mxu0 %v25
  %68 = vmatprep.subr.mxu0 0.0
  %69 = vmatpush1.msra.mxu0 %v24
  %70 = vmatprep.subr.mxu0 0.0
  %71 = vmatpush2.msra.mxu0 0.0
  %72 = vmatprep.subr.mxu0 0.0
  %73 = vmatpush2.msra.mxu0 0.0
  %74 = vmatprep.subr.mxu0 0.0
  %75 = vmatpush2.msra.mxu0 0.0
  %76 = vmatprep.subr.mxu0 0.0
  %77 = vmatpush2.msra.mxu0 0.0
  %78 = vmatprep.subr.mxu0 0.0
  %79 = vmatpush2.msra.mxu0 0.0
  %80 = vmatprep.subr.mxu0 0.0
  %81 = vmatpush2.msra.mxu0 0.0
  %82 = vmatprep.subr.mxu0 0.0
  %83 = vmatpush2.msra.mxu0 0.0
  %84 = vmatprep.subr.mxu0 0.0
  %85 = vmatpush2.msra.mxu0 0.0
  %86 = vmatprep.subr.mxu0 0.0
  %87 = vmatpush2.msra.mxu0 0.0
  %88 = vmatprep.subr.mxu0 0.0
  %89 = vmatpush2.msra.mxu0 0.0
  %90 = vmatprep.subr.mxu0 0.0
  %91 = vmatpush2.msra.mxu0 0.0
  %92 = vmatprep.subr.mxu0 0.0
  %93 = vmatpush2.msra.mxu0 0.0
  %94 = vmatprep.subr.mxu0 0.0
  %95 = vmatpush2.msra.mxu0 0.0
  %96 = vmatprep.subr.mxu0 0.0
  %97 = vmatpush2.msra.mxu0 0.0
  %98 = vmatprep.subr.mxu0 0.0
  %99 = vmatpush2.msra.mxu0 0.0
  %100 = vmatprep.subr.mxu0 0.0
  %101 = vmatpush2.msra.mxu0 0.0
  %102 = vmatprep.mubr.f32.mxu0 0.0
  %103 = vmatmul.mubr.f32.gmra.mxu0 %v36
  %v104 = vpop.f32.mrf.mxu0
  %v105 = vadd.f32 0.0, %v104
  %v106 = vpop.f32.mrf.mxu0
  %107 = vdwg.mxu0
  %v108 = vld [vmem:[%s2] sm:$0xff]
  %109 = vset.pattern.permute.xlu0 1
  %110 = vperm.xlu0 %109, %v23
  %v111 = vpop.permute.xlu0 %110
  %vm112 = vcmp.eq.s32.totalorder %v27, %v111
  %v113 = vsel %vm112, 1, 0
  %v114 = vcvt.s32.f32 %v113
  %v116 = vsel %vm34, %v114, 0
  %118 = vmatprep.subr.mxu0 0.0
  %119 = vmatpush1.msra.mxu0 0.0
  %120 = vmatprep.subr.mxu0 0.0
  %121 = vmatpush1.msra.mxu0 0.0
  %122 = vmatprep.subr.mxu0 0.0
  %123 = vmatpush1.msra.mxu0 0.0
  %124 = vmatprep.subr.mxu0 0.0
  %125 = vmatpush1.msra.mxu0 0.0
  %126 = vmatprep.subr.mxu0 0.0
  %127 = vmatpush1.msra.mxu0 0.0
  %128 = vmatprep.subr.mxu0 0.0
  %129 = vmatpush1.msra.mxu0 0.0
  %130 = vmatprep.subr.mxu0 0.0
  %131 = vmatpush1.msra.mxu0 0.0
  %132 = vmatprep.subr.mxu0 0.0
  %133 = vmatpush1.msra.mxu0 0.0
  %134 = vmatprep.subr.mxu0 0.0
  %135 = vmatpush1.msra.mxu0 0.0
  %136 = vmatprep.subr.mxu0 0.0
  %137 = vmatpush1.msra.mxu0 0.0
  %138 = vmatprep.subr.mxu0 0.0
  %139 = vmatpush1.msra.mxu0 0.0
  %140 = vmatprep.subr.mxu0 0.0
  %141 = vmatpush1.msra.mxu0 0.0
  %142 = vmatprep.subr.mxu0 0.0
  %143 = vmatpush1.msra.mxu0 0.0
  %144 = vmatprep.subr.mxu0 0.0
  %145 = vmatpush1.msra.mxu0 0.0
  %146 = vmatprep.subr.mxu0 0.0
  %147 = vmatpush1.msra.mxu0 %v25
  %148 = vmatprep.subr.mxu0 0.0
  %149 = vmatpush1.msra.mxu0 %v24
  %150 = vmatprep.subr.mxu0 0.0
  %151 = vmatpush2.msra.mxu0 0.0
  %152 = vmatprep.subr.mxu0 0.0
  %153 = vmatpush2.msra.mxu0 0.0
  %154 = vmatprep.subr.mxu0 0.0
  %155 = vmatpush2.msra.mxu0 0.0
  %156 = vmatprep.subr.mxu0 0.0
  %157 = vmatpush2.msra.mxu0 0.0
  %158 = vmatprep.subr.mxu0 0.0
  %159 = vmatpush2.msra.mxu0 0.0
  %160 = vmatprep.subr.mxu0 0.0
  %161 = vmatpush2.msra.mxu0 0.0
  %162 = vmatprep.subr.mxu0 0.0
  %163 = vmatpush2.msra.mxu0 0.0
  %164 = vmatprep.subr.mxu0 0.0
  %165 = vmatpush2.msra.mxu0 0.0
  %166 = vmatprep.subr.mxu0 0.0
  %167 = vmatpush2.msra.mxu0 0.0
  %168 = vmatprep.subr.mxu0 0.0
  %169 = vmatpush2.msra.mxu0 0.0
  %170 = vmatprep.subr.mxu0 0.0
  %171 = vmatpush2.msra.mxu0 0.0
  %172 = vmatprep.subr.mxu0 0.0
  %173 = vmatpush2.msra.mxu0 0.0
  %174 = vmatprep.subr.mxu0 0.0
  %175 = vmatpush2.msra.mxu0 0.0
  %176 = vmatprep.subr.mxu0 0.0
  %177 = vmatpush2.msra.mxu0 0.0
  %178 = vmatprep.subr.mxu0 0.0
  %179 = vmatpush2.msra.mxu0 0.0
  %180 = vmatprep.subr.mxu0 0.0
  %181 = vmatpush2.msra.mxu0 0.0
  %182 = vmatprep.mubr.f32.mxu0 0.0
  %183 = vmatmul.mubr.f32.gmra.mxu0 %v116
  %v184 = vpop.f32.mrf.mxu0
  %v185 = vadd.f32 0.0, %v184
  %v186 = vpop.f32.mrf.mxu0
  %187 = vdwg.mxu0
  %v188 = vld [vmem:[%s2 + $0x8] sm:$0xff]
  %vm189 = vcmask 64512
  %v191 = vsel %vm189, %v185, 0
  %193 = vmatprep.subr.mxu0 0.0
  %194 = vmatpush1.msra.mxu0 0.0
  %195 = vmatprep.subr.mxu0 0.0
  %196 = vmatpush1.msra.mxu0 0.0
  %197 = vmatprep.subr.mxu0 0.0
  %198 = vmatpush1.msra.mxu0 0.0
  %199 = vmatprep.subr.mxu0 0.0
  %200 = vmatpush1.msra.mxu0 0.0
  %201 = vmatprep.subr.mxu0 0.0
  %202 = vmatpush1.msra.mxu0 0.0
  %203 = vmatprep.subr.mxu0 0.0
  %204 = vmatpush1.msra.mxu0 0.0
  %205 = vmatprep.subr.mxu0 0.0
  %206 = vmatpush1.msra.mxu0 0.0
  %207 = vmatprep.subr.mxu0 0.0
  %208 = vmatpush1.msra.mxu0 0.0
  %209 = vmatprep.subr.mxu0 0.0
  %210 = vmatpush1.msra.mxu0 0.0
  %211 = vmatprep.subr.mxu0 0.0
  %212 = vmatpush1.msra.mxu0 0.0
  %213 = vmatprep.subr.mxu0 0.0
  %214 = vmatpush1.msra.mxu0 0.0
  %215 = vmatprep.subr.mxu0 0.0
  %216 = vmatpush1.msra.mxu0 0.0
  %217 = vmatprep.subr.mxu0 0.0
  %218 = vmatpush1.msra.mxu0 0.0
  %219 = vmatprep.subr.mxu0 0.0
  %220 = vmatpush1.msra.mxu0 0.0
  %221 = vmatprep.subr.mxu0 0.0
  %222 = vmatpush1.msra.mxu0 0.0
  %223 = vmatprep.subr.mxu0 0.0
  %224 = vmatpush1.msra.mxu0 %v188
  %225 = vmatprep.subr.mxu0 0.0
  %226 = vmatpush2.msra.mxu0 0.0
  %227 = vmatprep.subr.mxu0 0.0
  %228 = vmatpush2.msra.mxu0 0.0
  %229 = vmatprep.subr.mxu0 0.0
  %230 = vmatpush2.msra.mxu0 0.0
  %231 = vmatprep.subr.mxu0 0.0
  %232 = vmatpush2.msra.mxu0 0.0
  %233 = vmatprep.subr.mxu0 0.0
  %234 = vmatpush2.msra.mxu0 0.0
  %235 = vmatprep.subr.mxu0 0.0
  %236 = vmatpush2.msra.mxu0 0.0
  %237 = vmatprep.subr.mxu0 0.0
  %238 = vmatpush2.msra.mxu0 0.0
  %239 = vmatprep.subr.mxu0 0.0
  %240 = vmatpush2.msra.mxu0 0.0
  %241 = vmatprep.subr.mxu0 0.0
  %242 = vmatpush2.msra.mxu0 0.0
  %243 = vmatprep.subr.mxu0 0.0
  %244 = vmatpush2.msra.mxu0 0.0
  %245 = vmatprep.subr.mxu0 0.0
  %246 = vmatpush2.msra.mxu0 0.0
  %247 = vmatprep.subr.mxu0 0.0
  %248 = vmatpush2.msra.mxu0 0.0
  %249 = vmatprep.subr.mxu0 0.0
  %250 = vmatpush2.msra.mxu0 0.0
  %251 = vmatprep.subr.mxu0 0.0
  %252 = vmatpush2.msra.mxu0 0.0
  %253 = vmatprep.subr.mxu0 0.0
  %254 = vmatpush2.msra.mxu0 0.0
  %255 = vmatprep.subr.mxu0 0.0
  %256 = vmatpush2.msra.mxu0 0.0
  %257 = vmatprep.mubr.f32.mxu0 0.0
  %258 = vmatmul.mubr.f32.gmra.mxu0 %v191
  %v259 = vpop.f32.mrf.mxu0
  %v260 = vadd.f32 0.0, %v259
  %v261 = vpop.f32.mrf.mxu0
  %262 = vdwg.mxu0
  %v264 = vsel %vm189, %v105, 0
  %266 = vmatprep.subr.mxu0 0.0
  %267 = vmatpush1.msra.mxu0 0.0
  %268 = vmatprep.subr.mxu0 0.0
  %269 = vmatpush1.msra.mxu0 0.0
  %270 = vmatprep.subr.mxu0 0.0
  %271 = vmatpush1.msra.mxu0 0.0
  %272 = vmatprep.subr.mxu0 0.0
  %273 = vmatpush1.msra.mxu0 0.0
  %274 = vmatprep.subr.mxu0 0.0
  %275 = vmatpush1.msra.mxu0 0.0
  %276 = vmatprep.subr.mxu0 0.0
  %277 = vmatpush1.msra.mxu0 0.0
  %278 = vmatprep.subr.mxu0 0.0
  %279 = vmatpush1.msra.mxu0 0.0
  %280 = vmatprep.subr.mxu0 0.0
  %281 = vmatpush1.msra.mxu0 0.0
  %282 = vmatprep.subr.mxu0 0.0
  %283 = vmatpush1.msra.mxu0 0.0
  %284 = vmatprep.subr.mxu0 0.0
  %285 = vmatpush1.msra.mxu0 0.0
  %286 = vmatprep.subr.mxu0 0.0
  %287 = vmatpush1.msra.mxu0 0.0
  %288 = vmatprep.subr.mxu0 0.0
  %289 = vmatpush1.msra.mxu0 0.0
  %290 = vmatprep.subr.mxu0 0.0
  %291 = vmatpush1.msra.mxu0 0.0
  %292 = vmatprep.subr.mxu0 0.0
  %293 = vmatpush1.msra.mxu0 0.0
  %294 = vmatprep.subr.mxu0 0.0
  %295 = vmatpush1.msra.mxu0 0.0
  %296 = vmatprep.subr.mxu0 0.0
  %297 = vmatpush1.msra.mxu0 %v108
  %298 = vmatprep.subr.mxu0 0.0
  %299 = vmatpush2.msra.mxu0 0.0
  %300 = vmatprep.subr.mxu0 0.0
  %301 = vmatpush2.msra.mxu0 0.0
  %302 = vmatprep.subr.mxu0 0.0
  %303 = vmatpush2.msra.mxu0 0.0
  %304 = vmatprep.subr.mxu0 0.0
  %305 = vmatpush2.msra.mxu0 0.0
  %306 = vmatprep.subr.mxu0 0.0
  %307 = vmatpush2.msra.mxu0 0.0
  %308 = vmatprep.subr.mxu0 0.0
  %309 = vmatpush2.msra.mxu0 0.0
  %310 = vmatprep.subr.mxu0 0.0
  %311 = vmatpush2.msra.mxu0 0.0
  %312 = vmatprep.subr.mxu0 0.0
  %313 = vmatpush2.msra.mxu0 0.0
  %314 = vmatprep.subr.mxu0 0.0
  %315 = vmatpush2.msra.mxu0 0.0
  %316 = vmatprep.subr.mxu0 0.0
  %317 = vmatpush2.msra.mxu0 0.0
  %318 = vmatprep.subr.mxu0 0.0
  %319 = vmatpush2.msra.mxu0 0.0
  %320 = vmatprep.subr.mxu0 0.0
  %321 = vmatpush2.msra.mxu0 0.0
  %322 = vmatprep.subr.mxu0 0.0
  %323 = vmatpush2.msra.mxu0 0.0
  %324 = vmatprep.subr.mxu0 0.0
  %325 = vmatpush2.msra.mxu0 0.0
  %326 = vmatprep.subr.mxu0 0.0
  %327 = vmatpush2.msra.mxu0 0.0
  %328 = vmatprep.subr.mxu0 0.0
  %329 = vmatpush2.msra.mxu0 0.0
  %330 = vmatprep.mubr.f32.mxu0 0.0
  %331 = vmatmul.mubr.f32.gmra.mxu0 %v264
  %v332 = vpop.f32.mrf.mxu0
  %v333 = vadd.f32 %v260, %v332
  %v334 = vpop.f32.mrf.mxu0
  %335 = vdwg.mxu0
  %v336 = vld [vmem:[%s3] sm:$0x1]
  %v338 = vlaneseq
  %v339 = vshrl.u32 %v338, 7
  %v340 = vsub.s32 0, %v339
  %v341 = vrot.slane %v336, %v340
  %v343 = vadd.f32 %v333, %v341
  %v344 = vmax.f32 %v343, 0.0
  %v345 = vld [vmem:[%s4] sm:$0xff]
  %v346 = vld [vmem:[%s4 + $0x8] sm:$0xff]
  %v347 = vld [vmem:[%s4 + $0x10] sm:$0xff]
  %v348 = vld [vmem:[%s4 + $0x18] sm:$0xff]
  %v349 = vld [vmem:[%s4 + $0x20] sm:$0xff]
  %v350 = vld [vmem:[%s4 + $0x28] sm:$0xff]
  %v351 = vld [vmem:[%s4 + $0x30] sm:$0xff]
  %v352 = vld [vmem:[%s4 + $0x38] sm:$0xff]
  %v353 = vld [vmem:[%s4 + $0x40] sm:$0xff]
  %v354 = vld [vmem:[%s4 + $0x48] sm:$0xff]
  %v355 = vld [vmem:[%s4 + $0x50] sm:$0xff]
  %v356 = vld [vmem:[%s4 + $0x58] sm:$0xff]
  %v357 = vld [vmem:[%s4 + $0x60] sm:$0xff]
  %v358 = vld [vmem:[%s4 + $0x68] sm:$0xff]
  %v359 = vld [vmem:[%s4 + $0x70] sm:$0xff]
  %v360 = vld [vmem:[%s4 + $0x78] sm:$0xff]
  %v361 = vld [vmem:[%s5] sm:$0x1]
  %v363 = vlaneseq
  %v364 = vshrl.u32 %v363, 7
  %v365 = vsub.s32 0, %v364
  %v366 = vrot.slane %v361, %v365
  %368 = vmatprep.subr.mxu0 0.0
  %369 = vmatpush1.msra.mxu0 %v360
  %370 = vmatprep.subr.mxu0 0.0
  %371 = vmatpush1.msra.mxu0 %v359
  %372 = vmatprep.subr.mxu0 0.0
  %373 = vmatpush1.msra.mxu0 %v358
  %374 = vmatprep.subr.mxu0 0.0
  %375 = vmatpush1.msra.mxu0 %v357
  %376 = vmatprep.subr.mxu0 0.0
  %377 = vmatpush1.msra.mxu0 %v356
  %378 = vmatprep.subr.mxu0 0.0
  %379 = vmatpush1.msra.mxu0 %v355
  %380 = vmatprep.subr.mxu0 0.0
  %381 = vmatpush1.msra.mxu0 %v354
  %382 = vmatprep.subr.mxu0 0.0
  %383 = vmatpush1.msra.mxu0 %v353
  %384 = vmatprep.subr.mxu0 0.0
  %385 = vmatpush1.msra.mxu0 %v352
  %386 = vmatprep.subr.mxu0 0.0
  %387 = vmatpush1.msra.mxu0 %v351
  %388 = vmatprep.subr.mxu0 0.0
  %389 = vmatpush1.msra.mxu0 %v350
  %390 = vmatprep.subr.mxu0 0.0
  %391 = vmatpush1.msra.mxu0 %v349
  %392 = vmatprep.subr.mxu0 0.0
  %393 = vmatpush1.msra.mxu0 %v348
  %394 = vmatprep.subr.mxu0 0.0
  %395 = vmatpush1.msra.mxu0 %v347
  %396 = vmatprep.subr.mxu0 0.0
  %397 = vmatpush1.msra.mxu0 %v346
  %398 = vmatprep.subr.mxu0 0.0
  %399 = vmatpush1.msra.mxu0 %v345
  %400 = vmatprep.subr.mxu0 0.0
  %401 = vmatpush2.msra.mxu0 0.0
  %402 = vmatprep.subr.mxu0 0.0
  %403 = vmatpush2.msra.mxu0 0.0
  %404 = vmatprep.subr.mxu0 0.0
  %405 = vmatpush2.msra.mxu0 0.0
  %406 = vmatprep.subr.mxu0 0.0
  %407 = vmatpush2.msra.mxu0 0.0
  %408 = vmatprep.subr.mxu0 0.0
  %409 = vmatpush2.msra.mxu0 0.0
  %410 = vmatprep.subr.mxu0 0.0
  %411 = vmatpush2.msra.mxu0 0.0
  %412 = vmatprep.subr.mxu0 0.0
  %413 = vmatpush2.msra.mxu0 0.0
  %414 = vmatprep.subr.mxu0 0.0
  %415 = vmatpush2.msra.mxu0 0.0
  %416 = vmatprep.subr.mxu0 0.0
  %417 = vmatpush2.msra.mxu0 0.0
  %418 = vmatprep.subr.mxu0 0.0
  %419 = vmatpush2.msra.mxu0 0.0
  %420 = vmatprep.subr.mxu0 0.0
  %421 = vmatpush2.msra.mxu0 0.0
  %422 = vmatprep.subr.mxu0 0.0
  %423 = vmatpush2.msra.mxu0 0.0
  %424 = vmatprep.subr.mxu0 0.0
  %425 = vmatpush2.msra.mxu0 0.0
  %426 = vmatprep.subr.mxu0 0.0
  %427 = vmatpush2.msra.mxu0 0.0
  %428 = vmatprep.subr.mxu0 0.0
  %429 = vmatpush2.msra.mxu0 0.0
  %430 = vmatprep.subr.mxu0 0.0
  %431 = vmatpush2.msra.mxu0 0.0
  %432 = vmatprep.mubr.f32.mxu0 0.0
  %433 = vmatmul.mubr.f32.gmra.mxu0 %v344
  %v434 = vpop.f32.mrf.mxu0
  %v435 = vadd.f32 %v366, %v434
  %v436 = vpop.f32.mrf.mxu0
  %437 = vdwg.mxu0
  %438 = vmax.xlane.f32.xlu0 %v435
  %v439 = vpop.xlane.xlu0 %438
  %v440 = vsub.f32 %v435, %v439
  %v441 = vmul.f32 %v440, 1.442695
  %v442 = vpow.pop %v441
  %443 = vadd.xlane.f32.xlu0 %v442
  %v444 = vpop.xlane.xlu0 %443
  %v445 = vlog2.pop %v444
  %v446 = vmul.f32 %v445, 0.6931472
  %v447 = vsub.f32 %v440, %v446
  %448 = vst [vmem:[%s6] sm:$0xff] %v447
  // Predicated region
  $region26: #{_ngram_forward_batched.1} parent=0 // pred_check
    _
  $region27: #{_ngram_forward_batched.1} parent=0 // pred_check_branch
    %450 = sbr.rel (0) target = $region29
  $region28: #{_ngram_forward_batched.1} parent=0 // pred_region
    _
  $region29: #{_ngram_forward_batched.1} parent=0 // pred_fallthru
    _
  // Predicated region
  $region30: #{_ngram_forward_batched.1} parent=0 // pred_check
    _
  $region31: #{_ngram_forward_batched.1} parent=0 // pred_check_branch
    %452 = sbr.rel (0) target = $region33
  $region32: #{_ngram_forward_batched.1} parent=0 // pred_region
    _
  $region33: #{_ngram_forward_batched.1} parent=0 // pred_fallthru
    _

</llo_original>
